<compile_context>
chip_gen: v7x
topology: tpu7x:2x2x1
jax: 0.10.0
libtpu: 0.0.40
codegen_flags: <defaults>
</compile_context>

<pallas_src>
import functools
import math

import jax
import jax.numpy as jnp
from jax.experimental import pallas as pl
from jax.experimental.pallas import tpu as pltpu


def _sepconv_kernel(x_ref, w_ref, b_ref, o_ref, *, TH, Wo, KH, KW,
                    stride, dilation, use_act, leaky_slope):
    """One (batch, row-tile) grid step.

    x_ref : (Hp, Wp, Cin)        padded NHWC image for this batch (VMEM resident)
    w_ref : (KH*KW*Cin, Cout_p)  fused depthwise*pointwise*BN weight
    b_ref : (1, Cout_p)          fused bias (f32)
    o_ref : (TH*Wo, Cout_p)      flat (rows, channels) output tile, lane-dense
    """
    Cin = x_ref.shape[-1]
    t = pl.program_id(1)

    th_in = (TH - 1) * stride + (KH - 1) * dilation + 1
    row_start = pl.multiple_of(t * (TH * stride), TH * stride)
    x = x_ref[pl.ds(row_start, th_in)]                      # (th_in, Wp, Cin)

    # ---- im2col: gather the KH*KW shifted windows onto the lane axis ----
    taps = []
    for kh in range(KH):
        for kw in range(KW):
            h0 = kh * dilation
            w0 = kw * dilation
            if stride == 1:
                tap = x[h0:h0 + TH, w0:w0 + Wo, :]
            else:
                # TODO(synk): strided W slicing costs an XLU relayout per tap;
                # consolidate the W-subsample if stride>1 ever becomes hot.
                tap = x[h0:h0 + (TH - 1) * stride + 1:stride,
                        w0:w0 + (Wo - 1) * stride + 1:stride, :]
            taps.append(tap)
    patches = jnp.concatenate(taps, axis=-1)                # (TH, Wo, KH*KW*Cin)
    patches = patches.reshape(TH * Wo, KH * KW * Cin)       # flat (rows, K)

    # ---- single MXU contraction: depthwise + pointwise + BN scale fused ----
    y = jnp.dot(patches, w_ref[...], preferred_element_type=jnp.float32)
    y = y + b_ref[...]                                      # fused bias (f32)

    if use_act:                                             # LeakyReLU(0.1)
        y = jnp.where(y > 0, y, leaky_slope * y)

    o_ref[...] = y.astype(o_ref.dtype)


def _pick_row_tile(Ho, Wo):
    """Largest divisor of Ho keeping the matmul M-rows per tile <= ~2048."""
    limit = max(1, 2048 // max(Wo, 1))
    best = 1
    for d in range(1, Ho + 1):
        if Ho % d == 0 and d <= limit:
            best = d
    return best


def separable_conv2d(x_nchw, params, *, stride=1, padding=0, dilation=1,
                     batch_norm=False, activation=False, row_tile=None,
                     compute_dtype=None):
    """Forward pass matching the PyTorch SeparableConv2D module (BN in eval mode)."""
    dw_w, dw_b, pw_w, pw_b, bn_scale, bn_shift = params
    N, Cin, H, W = x_nchw.shape
    KH, KW, _ = dw_w.shape
    Cout = pw_w.shape[1]
    out_dtype = x_nchw.dtype
    if compute_dtype is None:
        compute_dtype = x_nchw.dtype

    Ho = (H + 2 * padding - dilation * (KH - 1) - 1) // stride + 1
    Wo = (W + 2 * padding - dilation * (KW - 1) - 1) // stride + 1

    # ---- row tiling (spatial blocking of the output / accumulator) ----
    if row_tile is not None and Ho % row_tile == 0:
        TH = row_tile
    else:
        TH = _pick_row_tile(Ho, Wo)
    T = Ho // TH
    if T > 1 and (TH * Wo) % 8 != 0:
        TH, T = Ho, 1          # fall back to whole-image tile to satisfy (8,128) tiling

    # ---- fold both conv biases and eval-mode BN into one weight/bias (wrapper-side) ----
    K = KH * KW * Cin
    Cout_p = ((Cout + 127) // 128) * 128           # lane-dense output channel dim
    w_eff = (dw_w[:, :, :, None].astype(jnp.float32) *
             pw_w[None, None, :, :].astype(jnp.float32)).reshape(K, Cout)
    b_eff = (dw_b.astype(jnp.float32) @ pw_w.astype(jnp.float32)
             + pw_b.astype(jnp.float32))
    if batch_norm:
        w_eff = w_eff * bn_scale[None, :].astype(jnp.float32)
        b_eff = b_eff * bn_scale.astype(jnp.float32) + bn_shift.astype(jnp.float32)
    w_eff = jnp.pad(w_eff, ((0, 0), (0, Cout_p - Cout))).astype(compute_dtype)
    b_eff = jnp.pad(b_eff, (0, Cout_p - Cout))[None, :].astype(jnp.float32)

    # ---- layout glue: NCHW -> NHWC, spatial zero-pad, MXU operand dtype ----
    x_nhwc = jnp.transpose(x_nchw, (0, 2, 3, 1)).astype(compute_dtype)
    x_pad = jnp.pad(x_nhwc, ((0, 0), (padding, padding), (padding, padding), (0, 0)))
    Hp, Wp = x_pad.shape[1], x_pad.shape[2]

    kernel = functools.partial(
        _sepconv_kernel, TH=TH, Wo=Wo, KH=KH, KW=KW, stride=stride,
        dilation=dilation, use_act=activation, leaky_slope=0.1)

    # ---- scheduler hints + scoped-VMEM sizing ----
    itm = jnp.dtype(compute_dtype).itemsize
    out_itm = jnp.dtype(out_dtype).itemsize
    th_in = (TH - 1) * stride + (KH - 1) * dilation + 1
    flops = 2 * N * Ho * Wo * K * Cout_p + 2 * N * Ho * Wo * Cout_p
    bytes_accessed = (x_pad.size * itm + w_eff.size * itm + b_eff.size * 4
                      + N * Ho * Wo * Cout_p * out_itm)
    vmem_est = (2 * Hp * Wp * Cin * itm                 # double-buffered input image
                + 2 * TH * Wo * Cout_p * out_itm        # double-buffered output tile
                + 2 * (K * Cout_p * itm + Cout_p * 4)   # fused weight / bias
                + th_in * Wp * Cin * itm                # sliced input rows
                + TH * Wo * (K * itm + 2 * Cout_p * 4)) # patches + f32 result
    cp_kwargs = {}
    if vmem_est > 30 * 1024 * 1024:
        # default scoped VMEM (16/32 MiB) is the real cap, not physical VMEM
        cp_kwargs["vmem_limit_bytes"] = min(int(vmem_est * 1.4), 96 * 1024 * 1024)

    out_flat = pl.pallas_call(
        kernel,
        out_shape=jax.ShapeDtypeStruct((N, Ho * Wo, Cout_p), out_dtype),
        grid_spec=pltpu.PrefetchScalarGridSpec(
            num_scalar_prefetch=0,
            grid=(N, T),
            in_specs=[
                pl.BlockSpec((None, Hp, Wp, Cin), lambda n, t: (n, 0, 0, 0)),
                pl.BlockSpec((K, Cout_p), lambda n, t: (0, 0)),
                pl.BlockSpec((1, Cout_p), lambda n, t: (0, 0)),
            ],
            out_specs=pl.BlockSpec((None, TH * Wo, Cout_p), lambda n, t: (n, t, 0)),
        ),
        compiler_params=pltpu.CompilerParams(
            dimension_semantics=("parallel", "parallel"), **cp_kwargs),
        cost_estimate=pl.CostEstimate(
            flops=flops, transcendentals=0, bytes_accessed=bytes_accessed),
    )(x_pad, w_eff, b_eff)

    # fix-up in the wrapper: strip channel padding, restore NCHW
    out = out_flat[:, :, :Cout].reshape(N, Ho, Wo, Cout)
    return jnp.transpose(out, (0, 3, 1, 2)).astype(out_dtype)


def init_params(key, in_channels, out_channels, kernel_size, eps=1e-5):
    """Deterministic init matching the module's __init__:
       kaiming_normal_(w, a=0.1), conv biases = 0, BN gamma=1 / beta=0,
       BN running stats mean=0 / var=1 (eval mode)."""
    k1, k2 = jax.random.split(key)
    gain = math.sqrt(2.0 / (1.0 + 0.1 ** 2))

    # depthwise weight: PyTorch shape (Cin, 1, KH, KW), fan_in = KH*KW
    std_dw = gain / math.sqrt(kernel_size * kernel_size)
    dw_w_pt = std_dw * jax.random.normal(
        k1, (in_channels, 1, kernel_size, kernel_size), jnp.float32)
    dw_w = jnp.transpose(dw_w_pt[:, 0, :, :], (1, 2, 0))        # (KH, KW, Cin)
    dw_b = jnp.zeros((in_channels,), jnp.float32)

    # pointwise weight: PyTorch shape (Cout, Cin, 1, 1), fan_in = Cin
    std_pw = gain / math.sqrt(in_channels)
    pw_w_pt = std_pw * jax.random.normal(
        k2, (out_channels, in_channels, 1, 1), jnp.float32)
    pw_w = jnp.transpose(pw_w_pt[:, :, 0, 0], (1, 0))           # (Cin, Cout)
    pw_b = jnp.zeros((out_channels,), jnp.float32)

    # BatchNorm2d eval-mode fused affine.
    # TODO(synk): PyTorch training-mode BN would use batch statistics; here we
    # use the freshly-initialized running stats (mean=0, var=1), i.e. eval mode.
    gamma = jnp.ones((out_channels,), jnp.float32)
    beta = jnp.zeros((out_channels,), jnp.float32)
    run_mean = jnp.zeros((out_channels,), jnp.float32)
    run_var = jnp.ones((out_channels,), jnp.float32)
    bn_scale = gamma / jnp.sqrt(run_var + eps)                   # (Cout,)
    bn_shift = beta - run_mean * bn_scale                        # (Cout,)

    return dw_w, dw_b, pw_w, pw_b, bn_scale, bn_shift, dw_w_pt, pw_w_pt


def _reference(x, dw_w_pt, pw_w_pt, params, stride, padding, dilation,
               batch_norm, activation):
    """Pure-JAX reference (lax convs) mirroring the PyTorch forward."""
    _, dw_b, _, pw_b, bn_scale, bn_shift = params
    Cin = x.shape[1]
    y = jax.lax.conv_general_dilated(
        x, dw_w_pt, window_strides=(stride, stride),
        padding=[(padding, padding), (padding, padding)],
        rhs_dilation=(dilation, dilation),
        dimension_numbers=("NCHW", "OIHW", "NCHW"),
        feature_group_count=Cin)
    y = y + dw_b[None, :, None, None]
    y = jax.lax.conv_general_dilated(
        y, pw_w_pt, window_strides=(1, 1), padding=[(0, 0), (0, 0)],
        dimension_numbers=("NCHW", "OIHW", "NCHW"))
    y = y + pw_b[None, :, None, None]
    if batch_norm:
        y = y * bn_scale[None, :, None, None] + bn_shift[None, :, None, None]
    if activation:
        y = jnp.where(y > 0, y, 0.1 * y)
    return y


if __name__ == "__main__":
    key = jax.random.PRNGKey(0)
    kx, kp = jax.random.split(key)

    N, Cin, H, W = 2, 4, 16, 16
    Cout, Ksz, stride, padding, dilation = 8, 3, 1, 1, 1
    batch_norm, activation = True, True

    x = jax.random.normal(kx, (N, Cin, H, W), jnp.float32)
    (dw_w, dw_b, pw_w, pw_b, bn_scale, bn_shift,
     dw_w_pt, pw_w_pt) = init_params(kp, Cin, Cout, Ksz)
    params = (dw_w, dw_b, pw_w, pw_b, bn_scale, bn_shift)

    # row_tile=8 -> grid (N=2, T=2): exercises the spatial-tiling path and gives
    # >= 2 independent parallel grid units per chip.
    out = separable_conv2d(x, params, stride=stride, padding=padding,
                           dilation=dilation, batch_norm=batch_norm,
                           activation=activation, row_tile=8)
    out = jax.block_until_ready(out)

    ref = _reference(x, dw_w_pt, pw_w_pt, params, stride, padding, dilation,
                     batch_norm, activation)
    assert out.shape == ref.shape == (N, Cout, H, W)
    assert jnp.max(jnp.abs(out - ref)) < 1e-4

    print("KERNEL_OK")
</pallas_src>

<mosaic_0001>
module attributes {stable_mosaic.version = 11 : i64} {
  func.func @_sepconv_kernel(%arg0: i32, %arg1: i32, %arg2: memref<1x18x18x4xf32, #tpu.memory_space<vmem>>, %arg3: memref<36x128xf32, #tpu.memory_space<vmem>>, %arg4: memref<1x128xf32, #tpu.memory_space<vmem>>, %arg5: memref<1x128x128xf32, #tpu.memory_space<vmem>>) attributes {dimension_semantics = [#tpu.dimension_semantics<parallel>, #tpu.dimension_semantics<parallel>], iteration_bounds = array<i64: 2, 2>, scalar_prefetch = 0 : i64, scratch_operands = 0 : i64, tpu.core_type = #tpu.core_type<tc>, window_params = [{transform_indices = @transform_0, window_bounds = array<i64: 1, 18, 18, 4>}, {pipeline_mode = #tpu.pipeline_mode<synchronous>, transform_indices = @transform_1, window_bounds = array<i64: 36, 128>}, {pipeline_mode = #tpu.pipeline_mode<synchronous>, transform_indices = @transform_2, window_bounds = array<i64: 1, 128>}, {transform_indices = @transform_3, window_bounds = array<i64: 1, 128, 128>}]} {
    %c8_i32 = arith.constant 8 : i32
    %0 = arith.muli %arg1, %c8_i32 : i32
    %1 = tpu.assume_multiple %0, 8 : i32
    %c0 = arith.constant 0 : index
    %2 = arith.index_cast %1 : i32 to index
    %c0_0 = arith.constant 0 : index
    %c0_1 = arith.constant 0 : index
    %3 = vector.load %arg2[%c0, %2, %c0_0, %c0_1] : memref<1x18x18x4xf32, #tpu.memory_space<vmem>>, vector<1x10x18x4xf32>
    %4 = vector.shape_cast %3 : vector<1x10x18x4xf32> to vector<10x18x4xf32>
    %5 = vector.extract_strided_slice %4 {offsets = [0, 0, 0], sizes = [8, 16, 4], strides = [1, 1, 1]} : vector<10x18x4xf32> to vector<8x16x4xf32>
    %6 = vector.extract_strided_slice %4 {offsets = [0, 1, 0], sizes = [8, 16, 4], strides = [1, 1, 1]} : vector<10x18x4xf32> to vector<8x16x4xf32>
    %7 = vector.extract_strided_slice %4 {offsets = [0, 2, 0], sizes = [8, 16, 4], strides = [1, 1, 1]} : vector<10x18x4xf32> to vector<8x16x4xf32>
    %8 = vector.extract_strided_slice %4 {offsets = [1, 0, 0], sizes = [8, 16, 4], strides = [1, 1, 1]} : vector<10x18x4xf32> to vector<8x16x4xf32>
    %9 = vector.extract_strided_slice %4 {offsets = [1, 1, 0], sizes = [8, 16, 4], strides = [1, 1, 1]} : vector<10x18x4xf32> to vector<8x16x4xf32>
    %10 = vector.extract_strided_slice %4 {offsets = [1, 2, 0], sizes = [8, 16, 4], strides = [1, 1, 1]} : vector<10x18x4xf32> to vector<8x16x4xf32>
    %11 = vector.extract_strided_slice %4 {offsets = [2, 0, 0], sizes = [8, 16, 4], strides = [1, 1, 1]} : vector<10x18x4xf32> to vector<8x16x4xf32>
    %12 = vector.extract_strided_slice %4 {offsets = [2, 1, 0], sizes = [8, 16, 4], strides = [1, 1, 1]} : vector<10x18x4xf32> to vector<8x16x4xf32>
    %13 = vector.extract_strided_slice %4 {offsets = [2, 2, 0], sizes = [8, 16, 4], strides = [1, 1, 1]} : vector<10x18x4xf32> to vector<8x16x4xf32>
    %14 = tpu.concatenate %5, %6, %7, %8, %9, %10, %11, %12, %13 in 2 : vector<8x16x4xf32>, vector<8x16x4xf32>, vector<8x16x4xf32>, vector<8x16x4xf32>, vector<8x16x4xf32>, vector<8x16x4xf32>, vector<8x16x4xf32>, vector<8x16x4xf32>, vector<8x16x4xf32> -> vector<8x16x36xf32>
    %15 = vector.shape_cast %14 : vector<8x16x36xf32> to vector<128x36xf32>
    %c0_2 = arith.constant 0 : index
    %c0_3 = arith.constant 0 : index
    %16 = vector.load %arg3[%c0_2, %c0_3] : memref<36x128xf32, #tpu.memory_space<vmem>>, vector<36x128xf32>
    %cst = arith.constant dense<0.000000e+00> : vector<128x128xf32>
    %17 = tpu.matmul %15, %16, %cst {dimension_numbers = #tpu.dot_dimension_numbers<[1], [0], [0], [1], [0, 0, 1, 1], [], []>} : vector<128x36xf32>, vector<36x128xf32>, vector<128x128xf32> -> vector<128x128xf32>
    %c0_4 = arith.constant 0 : index
    %c0_5 = arith.constant 0 : index
    %18 = vector.load %arg4[%c0_4, %c0_5] : memref<1x128xf32, #tpu.memory_space<vmem>>, vector<1x128xf32>
    %19 = vector.broadcast %18 : vector<1x128xf32> to vector<128x128xf32>
    %20 = arith.addf %17, %19 : vector<128x128xf32>
    %cst_6 = arith.constant 0.000000e+00 : f32
    %21 = vector.broadcast %cst_6 : f32 to vector<128x128xf32>
    %22 = arith.cmpf ogt, %20, %21 : vector<128x128xf32>
    %cst_7 = arith.constant 1.000000e-01 : f32
    %23 = vector.broadcast %cst_7 : f32 to vector<128x128xf32>
    %24 = arith.mulf %23, %20 : vector<128x128xf32>
    %25 = arith.select %22, %20, %24 : vector<128x128xi1>, vector<128x128xf32>
    %c0_8 = arith.constant 0 : index
    %c0_9 = arith.constant 0 : index
    %c0_10 = arith.constant 0 : index
    %26 = vector.load %arg5[%c0_8, %c0_9, %c0_10] : memref<1x128x128xf32, #tpu.memory_space<vmem>>, vector<1x128x128xf32>
    %27 = vector.shape_cast %26 : vector<1x128x128xf32> to vector<128x128xf32>
    %28 = vector.shape_cast %25 : vector<128x128xf32> to vector<1x128x128xf32>
    tpu.vector_store %arg5[%c0_8, %c0_9, %c0_10], %28 {strides = array<i32>} : memref<1x128x128xf32, #tpu.memory_space<vmem>>, vector<1x128x128xf32>,
    return
  }
  func.func @transform_0(%arg0: i32, %arg1: i32) -> (i32, i32, i32, i32) {
    %c0_i32 = arith.constant 0 : i32
    %c0_i32_0 = arith.constant 0 : i32
    %c0_i32_1 = arith.constant 0 : i32
    %c0_i32_2 = arith.constant 0 : i32
    return %arg0, %c0_i32, %c0_i32_0, %c0_i32_1 : i32, i32, i32, i32
  }
  func.func @transform_1(%arg0: i32, %arg1: i32) -> (i32, i32) {
    %c0_i32 = arith.constant 0 : i32
    %c0_i32_0 = arith.constant 0 : i32
    %c0_i32_1 = arith.constant 0 : i32
    return %c0_i32, %c0_i32_0 : i32, i32
  }
  func.func @transform_2(%arg0: i32, %arg1: i32) -> (i32, i32) {
    %c0_i32 = arith.constant 0 : i32
    %c0_i32_0 = arith.constant 0 : i32
    %c0_i32_1 = arith.constant 0 : i32
    return %c0_i32, %c0_i32_0 : i32, i32
  }
  func.func @transform_3(%arg0: i32, %arg1: i32) -> (i32, i32, i32) {
    %c0_i32 = arith.constant 0 : i32
    %c0_i32_0 = arith.constant 0 : i32
    return %arg0, %arg1, %c0_i32 : i32, i32, i32
  }
}

</mosaic_0001>

<llo_original>
// kernel: tpu_custom_call.1
$region0: #{tpu_custom_call.1}
  #allocation0 [shape = 'u32[]', space=smem, size = 0x4, offset = 0x4, fixed_abs, tag = 'smem constant byte address 0x4 - core index']
  #allocation1 [shape = 'u32[144,128]{1,0:T(1,128)}', space=vmem, size = 0x12000, scoped, tag = 'internal scratch']
  %s0 = inlined_call_operand.vmem [shape: f32[2,18,18,4], index: 0, kind: input, shape index: {}]
  %s1 = inlined_call_operand.vmem [shape: f32[36,128], index: 1, kind: input, shape index: {}]
  %s2 = inlined_call_operand.vmem [shape: f32[1,128], index: 2, kind: input, shape index: {}]
  %s3 = inlined_call_operand.hbm [shape: f32[2,256,128], index: 3, kind: output, shape index: {}]
  %s4 = sld [smem:[#allocation0]]
  $region45: #{tpu_custom_call.1} parent=0
    _
  %s6 = ssub.s32 1, %s4
  %s7 = scalar_select 0, %s6, %s4
  $region1: #{tpu_custom_call.1} parent=0
    #allocation2 [shape = 'u8[131072]{0}', space=vmem, size = 0x20000, scoped, tag = 'output window, operand 0']
    #allocation3 [shape = 's32[2]{0}', space=sflag, size = 0x8, scoped, tag = 'scoped memory for tpu_custom_call.1']
    %8 = vsyncpa [#allocation3], 0
    %s9 = scalar_lea.sflag [#allocation3], 1
    %10 = vsyncpa %s9, 0
    loop: start=0, step=1, limit=6
    $region2: #{tpu_custom_call.1} parent=1 // loop_pre_header
      _
    $region3: #{tpu_custom_call.1} parent=1 // loop_header
      %s12 = sphi 0, %s16
      %p13 = scmp.ge.s32.totalorder %s12, 6
      %s19 = sphi 0, %s31
      %s20 = sphi 0, %s27
      %s21 = sphi 0, %s19
      %s22 = sphi 0, %s20
      %s23 = sphi 0, %s21
      %s24 = sphi 0, %s22
      %s34 = sphi 0, %s36
      %s37 = sphi 0, %s34
      %s38 = sphi 0, %s37
      %s54 = sphi 0, %s38
      %s58 = sphi 0, %s58
      %s60 = sphi 0, %s58
      %s61 = sphi 0, %s60
      %s75 = sphi 0, %s61
      %s79 = sphi 0, %s79
      %s81 = sphi 0, %s79
      %s82 = sphi 0, %s81
      %s96 = sphi 0, %s82
      %s104 = sphi 0, %s106
      %s107 = sphi 0, %s104
      %s108 = sphi 0, %s107
      %s124 = sphi 0, %s108
    $region4: #{tpu_custom_call.1} parent=1 // loop_header_branch
      %15 = sbr.rel (%p13) target = $region8
    $region5: #{tpu_custom_call.1} parent=1 // loop_body
      %s17 = ssub.s32 %s12, 1
      %s18 = ssub.s32 %s12, 2
      %s25 = sadd.s32 1, %s20
      %p26 = scmp.ge.s32.totalorder %s25, 2
      %s27 = scalar_select %p26, 0, %s25
      %s28 = sadd.s32 1, %s19
      %s29 = scalar_select %p26, %s28, %s19
      %p30 = scmp.ge.s32.totalorder %s29, 2
      %s31 = scalar_select %p30, 0, %s29
      %s32 = ssub.s32 %s19, %s31
      %p33 = scmp.eq.s32.totalorder %s32, 0
      %s35 = sadd.s32 %s34, 1
      %s36 = scalar_select %p33, %s34, %s35
      %p39 = pneg %p33
      %p40 = scmp.eq.s32.totalorder %s12, 3
      %p41 = por %p39, %p40
      %p42 = scmp.ne.s32.totalorder %s34, %s37
      %p43 = scmp.eq.s32.totalorder %s12, 0
      %p44 = por %p42, %p43
      %p45 = scmp.ne.s32.totalorder %s34, %s37
      %p46 = scmp.eq.s32.totalorder %s17, 3
      %p47 = por %p45, %p46
      %p48 = scmp.ne.s32.totalorder %s37, %s38
      %p49 = scmp.eq.s32.totalorder %s17, 0
      %p50 = por %p48, %p49
      %p51 = scmp.ne.s32.totalorder %s37, %s38
      %p52 = scmp.eq.s32.totalorder %s18, 3
      %p53 = por %p51, %p52
      %p55 = scmp.ne.s32.totalorder %s38, %s54
      %p56 = scmp.eq.s32.totalorder %s18, 0
      %p57 = por %p55, %p56
      %s59 = sadd.s32 %s58, 1
      %p62 = scmp.eq.s32.totalorder %s12, 3
      %p63 = scmp.ne.s32.totalorder %s58, %s60
      %p64 = scmp.eq.s32.totalorder %s12, 0
      %p65 = por %p63, %p64
      %p66 = scmp.ne.s32.totalorder %s58, %s60
      %p67 = scmp.eq.s32.totalorder %s17, 3
      %p68 = por %p66, %p67
      %p69 = scmp.ne.s32.totalorder %s60, %s61
      %p70 = scmp.eq.s32.totalorder %s17, 0
      %p71 = por %p69, %p70
      %p72 = scmp.ne.s32.totalorder %s60, %s61
      %p73 = scmp.eq.s32.totalorder %s18, 3
      %p74 = por %p72, %p73
      %p76 = scmp.ne.s32.totalorder %s61, %s75
      %p77 = scmp.eq.s32.totalorder %s18, 0
      %p78 = por %p76, %p77
      %s80 = sadd.s32 %s79, 1
      %p83 = scmp.eq.s32.totalorder %s12, 3
      %p84 = scmp.ne.s32.totalorder %s79, %s81
      %p85 = scmp.eq.s32.totalorder %s12, 0
      %p86 = por %p84, %p85
      %p87 = scmp.ne.s32.totalorder %s79, %s81
      %p88 = scmp.eq.s32.totalorder %s17, 3
      %p89 = por %p87, %p88
      %p90 = scmp.ne.s32.totalorder %s81, %s82
      %p91 = scmp.eq.s32.totalorder %s17, 0
      %p92 = por %p90, %p91
      %p93 = scmp.ne.s32.totalorder %s81, %s82
      %p94 = scmp.eq.s32.totalorder %s18, 3
      %p95 = por %p93, %p94
      %p97 = scmp.ne.s32.totalorder %s82, %s96
      %p98 = scmp.eq.s32.totalorder %s18, 0
      %p99 = por %p97, %p98
      %s100 = ssub.s32 %s19, %s31
      %s101 = ssub.s32 %s20, %s27
      %s102 = sor.u32 %s100, %s101
      %p103 = scmp.eq.s32.totalorder %s102, 0
      %s105 = sadd.s32 %s104, 1
      %s106 = scalar_select %p103, %s104, %s105
      %p109 = pneg %p103
      %p110 = scmp.eq.s32.totalorder %s12, 3
      %p111 = por %p109, %p110
      %p112 = scmp.ne.s32.totalorder %s104, %s107
      %p113 = scmp.eq.s32.totalorder %s12, 0
      %p114 = por %p112, %p113
      %p115 = scmp.ne.s32.totalorder %s104, %s107
      %p116 = scmp.eq.s32.totalorder %s17, 3
      %p117 = por %p115, %p116
      %p118 = scmp.ne.s32.totalorder %s107, %s108
      %p119 = scmp.eq.s32.totalorder %s17, 0
      %p120 = por %p118, %p119
      %p121 = scmp.ne.s32.totalorder %s107, %s108
      %p122 = scmp.eq.s32.totalorder %s18, 3
      %p123 = por %p121, %p122
      %p125 = scmp.ne.s32.totalorder %s108, %s124
      %p126 = scmp.eq.s32.totalorder %s18, 0
      %p127 = por %p125, %p126
      %p128 = scmp.le.s32.totalorder 1, %s12
      %p129 = scmp.lt.s32.totalorder %s12, 5
      %p130 = pnand %p128, %p129
      %p131 = pneg %p130
      // Predicated region
      $region9: #{tpu_custom_call.1} parent=5 // pred_check
        _
      $region10: #{tpu_custom_call.1} parent=5 // pred_check_branch
        %133 = sbr.rel (%p130) target = $region12
      $region11: #{tpu_custom_call.1} parent=5 // pred_region
        %s134 = ssub.s32 %s12, 1
        // Predicated region
        $region13: #{tpu_custom_call.1} parent=11 // pred_check
          %p135 = pneg %p71
        $region14: #{tpu_custom_call.1} parent=11 // pred_check_branch
          %137 = sbr.rel (%p135) target = $region16
        $region15: #{tpu_custom_call.1} parent=11 // pred_region
          _
        $region16: #{tpu_custom_call.1} parent=11 // pred_fallthru
          _
        // Predicated region
        $region17: #{tpu_custom_call.1} parent=11 // pred_check
          %p138 = pneg %p92
        $region18: #{tpu_custom_call.1} parent=11 // pred_check_branch
          %140 = sbr.rel (%p138) target = $region20
        $region19: #{tpu_custom_call.1} parent=11 // pred_region
          _
        $region20: #{tpu_custom_call.1} parent=11 // pred_fallthru
          _
      $region12: #{tpu_custom_call.1} parent=5 // pred_fallthru
        _
      %p141 = scmp.lt.s32.totalorder %s12, 4
      // Predicated region
      $region21: #{tpu_custom_call.1} parent=5 // pred_check
        %p142 = pneg %p141
      $region22: #{tpu_custom_call.1} parent=5 // pred_check_branch
        %144 = sbr.rel (%p142) target = $region24
      $region23: #{tpu_custom_call.1} parent=5 // pred_region
        // Predicated region
        $region25: #{tpu_custom_call.1} parent=23 // pred_check
          %p145 = pneg %p44
        $region26: #{tpu_custom_call.1} parent=23 // pred_check_branch
          %147 = sbr.rel (%p145) target = $region28
        $region27: #{tpu_custom_call.1} parent=23 // pred_region
          %p148 = scmp.lt.s32.totalorder %s19, 1
          %s149 = scalar_select %p148, %s19, 1
          %s150 = smul.addr %s149, 54
          %s151 = smul.addr %s150, 8
          %s152 = scalar_lea.vmem %s0, %s151
        $region28: #{tpu_custom_call.1} parent=23 // pred_fallthru
          _
      $region24: #{tpu_custom_call.1} parent=5 // pred_fallthru
        _
      %p153 = scmp.le.s32.totalorder 1, %s12
      %p154 = scmp.lt.s32.totalorder %s12, 5
      %p155 = pnand %p153, %p154
      %p156 = pneg %p155
      // Predicated region
      $region29: #{tpu_custom_call.1} parent=5 // pred_check
        _
      $region30: #{tpu_custom_call.1} parent=5 // pred_check_branch
        %158 = sbr.rel (%p155) target = $region32
      $region31: #{tpu_custom_call.1} parent=5 // pred_region
        %s159 = ssub.s32 %s12, 1
        %p160 = scmp.lt.s32.totalorder %s21, 1
        %s161 = scalar_select %p160, %s21, 1
        %s162 = smul.addr %s161, 54
        %s163 = smul.addr %s162, 8
        %s164 = scalar_lea.vmem %s0, %s163
        %p165 = pneg %p50
        %p166 = pneg %p47
        %p167 = pneg %p71
        %p168 = pneg %p68
        %p169 = pneg %p92
        %p170 = pneg %p89
        %p171 = pneg %p120
        %p172 = pneg %p117
        %s173 = sand.u32 %s107, 1
        %s174 = scalar_lea.sflag [#allocation3], %s173
        %s175 = sand.u32 %s107, 1
        %s176 = smul.addr %s175, 128
        %s177 = scalar_lea.vmem [#allocation2], %s176
        %p178 = scmp.lt.s32.totalorder %s21, 1
        %s179 = scalar_select %p178, %s21, 1
        %s180 = smul.addr %s179, 54
        %s181 = smul.addr %s180, 8
        %s182 = scalar_lea.vmem %s0, %s181
        %s183 = smul.u32 16, %s22
        %s184 = smul.u32 %s22, 8
        %s185 = smul.u32 %s184, 24
        %s186 = scalar_lea.vmem %s182, %s185
        %v187 = vld [vmem:[%s186] sm:$0xff]
        %v188 = vld [vmem:[%s186 + $0x8] sm:$0xff]
        %v189 = vld [vmem:[%s186 + $0x10] sm:$0x3]
        %v190 = vld [vmem:[%s186 + $0x18] sm:$0xff]
        %v191 = vld [vmem:[%s186 + $0x20] sm:$0xff]
        %v192 = vld [vmem:[%s186 + $0x28] sm:$0x3]
        %v193 = vld [vmem:[%s186 + $0x30] sm:$0xff]
        %v194 = vld [vmem:[%s186 + $0x38] sm:$0xff]
        %v195 = vld [vmem:[%s186 + $0x40] sm:$0x3]
        %v196 = vld [vmem:[%s186 + $0x48] sm:$0xff]
        %v197 = vld [vmem:[%s186 + $0x50] sm:$0xff]
        %v198 = vld [vmem:[%s186 + $0x58] sm:$0x3]
        %v199 = vld [vmem:[%s186 + $0x60] sm:$0xff]
        %v200 = vld [vmem:[%s186 + $0x68] sm:$0xff]
        %v201 = vld [vmem:[%s186 + $0x70] sm:$0x3]
        %v202 = vld [vmem:[%s186 + $0x78] sm:$0xff]
        %v203 = vld [vmem:[%s186 + $0x80] sm:$0xff]
        %v204 = vld [vmem:[%s186 + $0x88] sm:$0x3]
        %v205 = vld [vmem:[%s186 + $0x90] sm:$0xff]
        %v206 = vld [vmem:[%s186 + $0x98] sm:$0xff]
        %v207 = vld [vmem:[%s186 + $0xa0] sm:$0x3]
        %v208 = vld [vmem:[%s186 + $0xa8] sm:$0xff]
        %v209 = vld [vmem:[%s186 + $0xb0] sm:$0xff]
        %v210 = vld [vmem:[%s186 + $0xb8] sm:$0x3]
        %v211 = vld [vmem:[%s186 + $0xc0] sm:$0xff]
        %v212 = vld [vmem:[%s186 + $0xc8] sm:$0xff]
        %v213 = vld [vmem:[%s186 + $0xd0] sm:$0x3]
        %v214 = vld [vmem:[%s186 + $0xd8] sm:$0xff]
        %v215 = vld [vmem:[%s186 + $0xe0] sm:$0xff]
        %v216 = vld [vmem:[%s186 + $0xe8] sm:$0x3]
        %vm241 = vcmask 1046528
        %v242 = vrot.slane %v187, 1
        %v243 = vrot.slane %v188, 1
        %v244 = vsel %vm241, %v242, %v243
        %v245 = vrot.slane %v189, 1
        %v246 = vsel %vm241, %v243, %v245
        %v247 = vrot.slane %v190, 1
        %v248 = vrot.slane %v191, 1
        %v249 = vsel %vm241, %v247, %v248
        %v250 = vrot.slane %v192, 1
        %v251 = vsel %vm241, %v248, %v250
        %v252 = vrot.slane %v193, 1
        %v253 = vrot.slane %v194, 1
        %v254 = vsel %vm241, %v252, %v253
        %v255 = vrot.slane %v195, 1
        %v256 = vsel %vm241, %v253, %v255
        %v257 = vrot.slane %v196, 1
        %v258 = vrot.slane %v197, 1
        %v259 = vsel %vm241, %v257, %v258
        %v260 = vrot.slane %v198, 1
        %v261 = vsel %vm241, %v258, %v260
        %v262 = vrot.slane %v199, 1
        %v263 = vrot.slane %v200, 1
        %v264 = vsel %vm241, %v262, %v263
        %v265 = vrot.slane %v201, 1
        %v266 = vsel %vm241, %v263, %v265
        %v267 = vrot.slane %v202, 1
        %v268 = vrot.slane %v203, 1
        %v269 = vsel %vm241, %v267, %v268
        %v270 = vrot.slane %v204, 1
        %v271 = vsel %vm241, %v268, %v270
        %v272 = vrot.slane %v205, 1
        %v273 = vrot.slane %v206, 1
        %v274 = vsel %vm241, %v272, %v273
        %v275 = vrot.slane %v207, 1
        %v276 = vsel %vm241, %v273, %v275
        %v277 = vrot.slane %v208, 1
        %v278 = vrot.slane %v209, 1
        %v279 = vsel %vm241, %v277, %v278
        %v280 = vrot.slane %v210, 1
        %v281 = vsel %vm241, %v278, %v280
        %282 = vrot.lane.b32.xlu0 %v244, 4
        %v283 = vpop.permute.xlu0 %282
        %284 = vrot.lane.b32.xlu0 %v246, 4
        %v285 = vpop.permute.xlu0 %284
        %286 = vrot.lane.b32.xlu0 %v249, 4
        %v287 = vpop.permute.xlu0 %286
        %288 = vrot.lane.b32.xlu0 %v251, 4
        %v289 = vpop.permute.xlu0 %288
        %290 = vrot.lane.b32.xlu0 %v254, 4
        %v291 = vpop.permute.xlu0 %290
        %292 = vrot.lane.b32.xlu0 %v256, 4
        %v293 = vpop.permute.xlu0 %292
        %294 = vrot.lane.b32.xlu0 %v259, 4
        %v295 = vpop.permute.xlu0 %294
        %296 = vrot.lane.b32.xlu0 %v261, 4
        %v297 = vpop.permute.xlu0 %296
        %298 = vrot.lane.b32.xlu0 %v264, 4
        %v299 = vpop.permute.xlu0 %298
        %300 = vrot.lane.b32.xlu0 %v266, 4
        %v301 = vpop.permute.xlu0 %300
        %302 = vrot.lane.b32.xlu0 %v269, 4
        %v303 = vpop.permute.xlu0 %302
        %304 = vrot.lane.b32.xlu0 %v271, 4
        %v305 = vpop.permute.xlu0 %304
        %306 = vrot.lane.b32.xlu0 %v274, 4
        %v307 = vpop.permute.xlu0 %306
        %308 = vrot.lane.b32.xlu0 %v276, 4
        %v309 = vpop.permute.xlu0 %308
        %310 = vrot.lane.b32.xlu0 %v279, 4
        %v311 = vpop.permute.xlu0 %310
        %312 = vrot.lane.b32.xlu0 %v281, 4
        %v313 = vpop.permute.xlu0 %312
        %vm330 = vcmask 1045504
        %v331 = vrot.slane %v187, 2
        %v332 = vrot.slane %v188, 2
        %v333 = vsel %vm330, %v331, %v332
        %v334 = vrot.slane %v189, 2
        %v335 = vsel %vm330, %v332, %v334
        %v336 = vrot.slane %v190, 2
        %v337 = vrot.slane %v191, 2
        %v338 = vsel %vm330, %v336, %v337
        %v339 = vrot.slane %v192, 2
        %v340 = vsel %vm330, %v337, %v339
        %v341 = vrot.slane %v193, 2
        %v342 = vrot.slane %v194, 2
        %v343 = vsel %vm330, %v341, %v342
        %v344 = vrot.slane %v195, 2
        %v345 = vsel %vm330, %v342, %v344
        %v346 = vrot.slane %v196, 2
        %v347 = vrot.slane %v197, 2
        %v348 = vsel %vm330, %v346, %v347
        %v349 = vrot.slane %v198, 2
        %v350 = vsel %vm330, %v347, %v349
        %v351 = vrot.slane %v199, 2
        %v352 = vrot.slane %v200, 2
        %v353 = vsel %vm330, %v351, %v352
        %v354 = vrot.slane %v201, 2
        %v355 = vsel %vm330, %v352, %v354
        %v356 = vrot.slane %v202, 2
        %v357 = vrot.slane %v203, 2
        %v358 = vsel %vm330, %v356, %v357
        %v359 = vrot.slane %v204, 2
        %v360 = vsel %vm330, %v357, %v359
        %v361 = vrot.slane %v205, 2
        %v362 = vrot.slane %v206, 2
        %v363 = vsel %vm330, %v361, %v362
        %v364 = vrot.slane %v207, 2
        %v365 = vsel %vm330, %v362, %v364
        %v366 = vrot.slane %v208, 2
        %v367 = vrot.slane %v209, 2
        %v368 = vsel %vm330, %v366, %v367
        %v369 = vrot.slane %v210, 2
        %v370 = vsel %vm330, %v367, %v369
        %371 = vrot.lane.b32.xlu0 %v333, 8
        %v372 = vpop.permute.xlu0 %371
        %373 = vrot.lane.b32.xlu0 %v335, 8
        %v374 = vpop.permute.xlu0 %373
        %375 = vrot.lane.b32.xlu0 %v338, 8
        %v376 = vpop.permute.xlu0 %375
        %377 = vrot.lane.b32.xlu0 %v340, 8
        %v378 = vpop.permute.xlu0 %377
        %379 = vrot.lane.b32.xlu0 %v343, 8
        %v380 = vpop.permute.xlu0 %379
        %381 = vrot.lane.b32.xlu0 %v345, 8
        %v382 = vpop.permute.xlu0 %381
        %383 = vrot.lane.b32.xlu0 %v348, 8
        %v384 = vpop.permute.xlu0 %383
        %385 = vrot.lane.b32.xlu0 %v350, 8
        %v386 = vpop.permute.xlu0 %385
        %387 = vrot.lane.b32.xlu0 %v353, 8
        %v388 = vpop.permute.xlu0 %387
        %389 = vrot.lane.b32.xlu0 %v355, 8
        %v390 = vpop.permute.xlu0 %389
        %391 = vrot.lane.b32.xlu0 %v358, 8
        %v392 = vpop.permute.xlu0 %391
        %393 = vrot.lane.b32.xlu0 %v360, 8
        %v394 = vpop.permute.xlu0 %393
        %395 = vrot.lane.b32.xlu0 %v363, 8
        %v396 = vpop.permute.xlu0 %395
        %397 = vrot.lane.b32.xlu0 %v365, 8
        %v398 = vpop.permute.xlu0 %397
        %399 = vrot.lane.b32.xlu0 %v368, 8
        %v400 = vpop.permute.xlu0 %399
        %401 = vrot.lane.b32.xlu0 %v370, 8
        %v402 = vpop.permute.xlu0 %401
        %421 = vrot.lane.b32.xlu0 %v190, 12
        %v422 = vpop.permute.xlu0 %421
        %423 = vrot.lane.b32.xlu0 %v191, 12
        %v424 = vpop.permute.xlu0 %423
        %425 = vrot.lane.b32.xlu0 %v193, 12
        %v426 = vpop.permute.xlu0 %425
        %427 = vrot.lane.b32.xlu0 %v194, 12
        %v428 = vpop.permute.xlu0 %427
        %429 = vrot.lane.b32.xlu0 %v196, 12
        %v430 = vpop.permute.xlu0 %429
        %431 = vrot.lane.b32.xlu0 %v197, 12
        %v432 = vpop.permute.xlu0 %431
        %433 = vrot.lane.b32.xlu0 %v199, 12
        %v434 = vpop.permute.xlu0 %433
        %435 = vrot.lane.b32.xlu0 %v200, 12
        %v436 = vpop.permute.xlu0 %435
        %437 = vrot.lane.b32.xlu0 %v202, 12
        %v438 = vpop.permute.xlu0 %437
        %439 = vrot.lane.b32.xlu0 %v203, 12
        %v440 = vpop.permute.xlu0 %439
        %441 = vrot.lane.b32.xlu0 %v205, 12
        %v442 = vpop.permute.xlu0 %441
        %443 = vrot.lane.b32.xlu0 %v206, 12
        %v444 = vpop.permute.xlu0 %443
        %445 = vrot.lane.b32.xlu0 %v208, 12
        %v446 = vpop.permute.xlu0 %445
        %447 = vrot.lane.b32.xlu0 %v209, 12
        %v448 = vpop.permute.xlu0 %447
        %449 = vrot.lane.b32.xlu0 %v211, 12
        %v450 = vpop.permute.xlu0 %449
        %451 = vrot.lane.b32.xlu0 %v212, 12
        %v452 = vpop.permute.xlu0 %451
        %v470 = vrot.slane %v211, 1
        %v471 = vrot.slane %v212, 1
        %v472 = vsel %vm241, %v470, %v471
        %v473 = vrot.slane %v213, 1
        %v474 = vsel %vm241, %v471, %v473
        %475 = vrot.lane.b32.xlu0 %v249, 16
        %v476 = vpop.permute.xlu0 %475
        %477 = vrot.lane.b32.xlu0 %v251, 16
        %v478 = vpop.permute.xlu0 %477
        %479 = vrot.lane.b32.xlu0 %v254, 16
        %v480 = vpop.permute.xlu0 %479
        %481 = vrot.lane.b32.xlu0 %v256, 16
        %v482 = vpop.permute.xlu0 %481
        %483 = vrot.lane.b32.xlu0 %v259, 16
        %v484 = vpop.permute.xlu0 %483
        %485 = vrot.lane.b32.xlu0 %v261, 16
        %v486 = vpop.permute.xlu0 %485
        %487 = vrot.lane.b32.xlu0 %v264, 16
        %v488 = vpop.permute.xlu0 %487
        %489 = vrot.lane.b32.xlu0 %v266, 16
        %v490 = vpop.permute.xlu0 %489
        %491 = vrot.lane.b32.xlu0 %v269, 16
        %v492 = vpop.permute.xlu0 %491
        %493 = vrot.lane.b32.xlu0 %v271, 16
        %v494 = vpop.permute.xlu0 %493
        %495 = vrot.lane.b32.xlu0 %v274, 16
        %v496 = vpop.permute.xlu0 %495
        %497 = vrot.lane.b32.xlu0 %v276, 16
        %v498 = vpop.permute.xlu0 %497
        %499 = vrot.lane.b32.xlu0 %v279, 16
        %v500 = vpop.permute.xlu0 %499
        %501 = vrot.lane.b32.xlu0 %v281, 16
        %v502 = vpop.permute.xlu0 %501
        %503 = vrot.lane.b32.xlu0 %v472, 16
        %v504 = vpop.permute.xlu0 %503
        %505 = vrot.lane.b32.xlu0 %v474, 16
        %v506 = vpop.permute.xlu0 %505
        %v523 = vrot.slane %v211, 2
        %v524 = vrot.slane %v212, 2
        %v525 = vsel %vm330, %v523, %v524
        %v526 = vrot.slane %v213, 2
        %v527 = vsel %vm330, %v524, %v526
        %528 = vrot.lane.b32.xlu0 %v338, 20
        %v529 = vpop.permute.xlu0 %528
        %530 = vrot.lane.b32.xlu0 %v340, 20
        %v531 = vpop.permute.xlu0 %530
        %532 = vrot.lane.b32.xlu0 %v343, 20
        %v533 = vpop.permute.xlu0 %532
        %534 = vrot.lane.b32.xlu0 %v345, 20
        %v535 = vpop.permute.xlu0 %534
        %536 = vrot.lane.b32.xlu0 %v348, 20
        %v537 = vpop.permute.xlu0 %536
        %538 = vrot.lane.b32.xlu0 %v350, 20
        %v539 = vpop.permute.xlu0 %538
        %540 = vrot.lane.b32.xlu0 %v353, 20
        %v541 = vpop.permute.xlu0 %540
        %542 = vrot.lane.b32.xlu0 %v355, 20
        %v543 = vpop.permute.xlu0 %542
        %544 = vrot.lane.b32.xlu0 %v358, 20
        %v545 = vpop.permute.xlu0 %544
        %546 = vrot.lane.b32.xlu0 %v360, 20
        %v547 = vpop.permute.xlu0 %546
        %548 = vrot.lane.b32.xlu0 %v363, 20
        %v549 = vpop.permute.xlu0 %548
        %550 = vrot.lane.b32.xlu0 %v365, 20
        %v551 = vpop.permute.xlu0 %550
        %552 = vrot.lane.b32.xlu0 %v368, 20
        %v553 = vpop.permute.xlu0 %552
        %554 = vrot.lane.b32.xlu0 %v370, 20
        %v555 = vpop.permute.xlu0 %554
        %556 = vrot.lane.b32.xlu0 %v525, 20
        %v557 = vpop.permute.xlu0 %556
        %558 = vrot.lane.b32.xlu0 %v527, 20
        %v559 = vpop.permute.xlu0 %558
        %578 = vrot.lane.b32.xlu0 %v193, 24
        %v579 = vpop.permute.xlu0 %578
        %580 = vrot.lane.b32.xlu0 %v194, 24
        %v581 = vpop.permute.xlu0 %580
        %582 = vrot.lane.b32.xlu0 %v196, 24
        %v583 = vpop.permute.xlu0 %582
        %584 = vrot.lane.b32.xlu0 %v197, 24
        %v585 = vpop.permute.xlu0 %584
        %586 = vrot.lane.b32.xlu0 %v199, 24
        %v587 = vpop.permute.xlu0 %586
        %588 = vrot.lane.b32.xlu0 %v200, 24
        %v589 = vpop.permute.xlu0 %588
        %590 = vrot.lane.b32.xlu0 %v202, 24
        %v591 = vpop.permute.xlu0 %590
        %592 = vrot.lane.b32.xlu0 %v203, 24
        %v593 = vpop.permute.xlu0 %592
        %594 = vrot.lane.b32.xlu0 %v205, 24
        %v595 = vpop.permute.xlu0 %594
        %596 = vrot.lane.b32.xlu0 %v206, 24
        %v597 = vpop.permute.xlu0 %596
        %598 = vrot.lane.b32.xlu0 %v208, 24
        %v599 = vpop.permute.xlu0 %598
        %600 = vrot.lane.b32.xlu0 %v209, 24
        %v601 = vpop.permute.xlu0 %600
        %602 = vrot.lane.b32.xlu0 %v211, 24
        %v603 = vpop.permute.xlu0 %602
        %604 = vrot.lane.b32.xlu0 %v212, 24
        %v605 = vpop.permute.xlu0 %604
        %606 = vrot.lane.b32.xlu0 %v214, 24
        %v607 = vpop.permute.xlu0 %606
        %608 = vrot.lane.b32.xlu0 %v215, 24
        %v609 = vpop.permute.xlu0 %608
        %v627 = vrot.slane %v214, 1
        %v628 = vrot.slane %v215, 1
        %v629 = vsel %vm241, %v627, %v628
        %v630 = vrot.slane %v216, 1
        %v631 = vsel %vm241, %v628, %v630
        %632 = vrot.lane.b32.xlu0 %v254, 28
        %v633 = vpop.permute.xlu0 %632
        %634 = vrot.lane.b32.xlu0 %v256, 28
        %v635 = vpop.permute.xlu0 %634
        %636 = vrot.lane.b32.xlu0 %v259, 28
        %v637 = vpop.permute.xlu0 %636
        %638 = vrot.lane.b32.xlu0 %v261, 28
        %v639 = vpop.permute.xlu0 %638
        %640 = vrot.lane.b32.xlu0 %v264, 28
        %v641 = vpop.permute.xlu0 %640
        %642 = vrot.lane.b32.xlu0 %v266, 28
        %v643 = vpop.permute.xlu0 %642
        %644 = vrot.lane.b32.xlu0 %v269, 28
        %v645 = vpop.permute.xlu0 %644
        %646 = vrot.lane.b32.xlu0 %v271, 28
        %v647 = vpop.permute.xlu0 %646
        %648 = vrot.lane.b32.xlu0 %v274, 28
        %v649 = vpop.permute.xlu0 %648
        %650 = vrot.lane.b32.xlu0 %v276, 28
        %v651 = vpop.permute.xlu0 %650
        %652 = vrot.lane.b32.xlu0 %v279, 28
        %v653 = vpop.permute.xlu0 %652
        %654 = vrot.lane.b32.xlu0 %v281, 28
        %v655 = vpop.permute.xlu0 %654
        %656 = vrot.lane.b32.xlu0 %v472, 28
        %v657 = vpop.permute.xlu0 %656
        %658 = vrot.lane.b32.xlu0 %v474, 28
        %v659 = vpop.permute.xlu0 %658
        %660 = vrot.lane.b32.xlu0 %v629, 28
        %v661 = vpop.permute.xlu0 %660
        %662 = vrot.lane.b32.xlu0 %v631, 28
        %v663 = vpop.permute.xlu0 %662
        %v680 = vrot.slane %v214, 2
        %v681 = vrot.slane %v215, 2
        %v682 = vsel %vm330, %v680, %v681
        %v683 = vrot.slane %v216, 2
        %v684 = vsel %vm330, %v681, %v683
        %685 = vrot.lane.b32.xlu0 %v343, 32
        %v686 = vpop.permute.xlu0 %685
        %687 = vrot.lane.b32.xlu0 %v345, 32
        %v688 = vpop.permute.xlu0 %687
        %689 = vrot.lane.b32.xlu0 %v348, 32
        %v690 = vpop.permute.xlu0 %689
        %691 = vrot.lane.b32.xlu0 %v350, 32
        %v692 = vpop.permute.xlu0 %691
        %693 = vrot.lane.b32.xlu0 %v353, 32
        %v694 = vpop.permute.xlu0 %693
        %695 = vrot.lane.b32.xlu0 %v355, 32
        %v696 = vpop.permute.xlu0 %695
        %697 = vrot.lane.b32.xlu0 %v358, 32
        %v698 = vpop.permute.xlu0 %697
        %699 = vrot.lane.b32.xlu0 %v360, 32
        %v700 = vpop.permute.xlu0 %699
        %701 = vrot.lane.b32.xlu0 %v363, 32
        %v702 = vpop.permute.xlu0 %701
        %703 = vrot.lane.b32.xlu0 %v365, 32
        %v704 = vpop.permute.xlu0 %703
        %705 = vrot.lane.b32.xlu0 %v368, 32
        %v706 = vpop.permute.xlu0 %705
        %707 = vrot.lane.b32.xlu0 %v370, 32
        %v708 = vpop.permute.xlu0 %707
        %709 = vrot.lane.b32.xlu0 %v525, 32
        %v710 = vpop.permute.xlu0 %709
        %711 = vrot.lane.b32.xlu0 %v527, 32
        %v712 = vpop.permute.xlu0 %711
        %713 = vrot.lane.b32.xlu0 %v682, 32
        %v714 = vpop.permute.xlu0 %713
        %715 = vrot.lane.b32.xlu0 %v684, 32
        %v716 = vpop.permute.xlu0 %715
        %vm733 = vcmask 31744
        %v734 = vsel %vm733, %v187, %v283
        %v735 = vsel %vm733, %v188, %v285
        %v736 = vsel %vm733, %v190, %v287
        %v737 = vsel %vm733, %v191, %v289
        %v738 = vsel %vm733, %v193, %v291
        %v739 = vsel %vm733, %v194, %v293
        %v740 = vsel %vm733, %v196, %v295
        %v741 = vsel %vm733, %v197, %v297
        %v742 = vsel %vm733, %v199, %v299
        %v743 = vsel %vm733, %v200, %v301
        %v744 = vsel %vm733, %v202, %v303
        %v745 = vsel %vm733, %v203, %v305
        %v746 = vsel %vm733, %v205, %v307
        %v747 = vsel %vm733, %v206, %v309
        %v748 = vsel %vm733, %v208, %v311
        %v749 = vsel %vm733, %v209, %v313
        %vm750 = vcmask 64512
        %v751 = vsel %vm750, %v734, %v372
        %v752 = vsel %vm750, %v735, %v374
        %v753 = vsel %vm750, %v736, %v376
        %v754 = vsel %vm750, %v737, %v378
        %v755 = vsel %vm750, %v738, %v380
        %v756 = vsel %vm750, %v739, %v382
        %v757 = vsel %vm750, %v740, %v384
        %v758 = vsel %vm750, %v741, %v386
        %v759 = vsel %vm750, %v742, %v388
        %v760 = vsel %vm750, %v743, %v390
        %v761 = vsel %vm750, %v744, %v392
        %v762 = vsel %vm750, %v745, %v394
        %v763 = vsel %vm750, %v746, %v396
        %v764 = vsel %vm750, %v747, %v398
        %v765 = vsel %vm750, %v748, %v400
        %v766 = vsel %vm750, %v749, %v402
        %vm767 = vcmask 97280
        %v768 = vsel %vm767, %v751, %v422
        %v769 = vsel %vm767, %v752, %v424
        %v770 = vsel %vm767, %v753, %v426
        %v771 = vsel %vm767, %v754, %v428
        %v772 = vsel %vm767, %v755, %v430
        %v773 = vsel %vm767, %v756, %v432
        %v774 = vsel %vm767, %v757, %v434
        %v775 = vsel %vm767, %v758, %v436
        %v776 = vsel %vm767, %v759, %v438
        %v777 = vsel %vm767, %v760, %v440
        %v778 = vsel %vm767, %v761, %v442
        %v779 = vsel %vm767, %v762, %v444
        %v780 = vsel %vm767, %v763, %v446
        %v781 = vsel %vm767, %v764, %v448
        %v782 = vsel %vm767, %v765, %v450
        %v783 = vsel %vm767, %v766, %v452
        %vm784 = vcmask 130048
        %v785 = vsel %vm784, %v768, %v476
        %v786 = vsel %vm784, %v769, %v478
        %v787 = vsel %vm784, %v770, %v480
        %v788 = vsel %vm784, %v771, %v482
        %v789 = vsel %vm784, %v772, %v484
        %v790 = vsel %vm784, %v773, %v486
        %v791 = vsel %vm784, %v774, %v488
        %v792 = vsel %vm784, %v775, %v490
        %v793 = vsel %vm784, %v776, %v492
        %v794 = vsel %vm784, %v777, %v494
        %v795 = vsel %vm784, %v778, %v496
        %v796 = vsel %vm784, %v779, %v498
        %v797 = vsel %vm784, %v780, %v500
        %v798 = vsel %vm784, %v781, %v502
        %v799 = vsel %vm784, %v782, %v504
        %v800 = vsel %vm784, %v783, %v506
        %vm801 = vcmask 162816
        %v802 = vsel %vm801, %v785, %v529
        %v803 = vsel %vm801, %v786, %v531
        %v804 = vsel %vm801, %v787, %v533
        %v805 = vsel %vm801, %v788, %v535
        %v806 = vsel %vm801, %v789, %v537
        %v807 = vsel %vm801, %v790, %v539
        %v808 = vsel %vm801, %v791, %v541
        %v809 = vsel %vm801, %v792, %v543
        %v810 = vsel %vm801, %v793, %v545
        %v811 = vsel %vm801, %v794, %v547
        %v812 = vsel %vm801, %v795, %v549
        %v813 = vsel %vm801, %v796, %v551
        %v814 = vsel %vm801, %v797, %v553
        %v815 = vsel %vm801, %v798, %v555
        %v816 = vsel %vm801, %v799, %v557
        %v817 = vsel %vm801, %v800, %v559
        %vm818 = vcmask 195584
        %v819 = vsel %vm818, %v802, %v579
        %v820 = vsel %vm818, %v803, %v581
        %v821 = vsel %vm818, %v804, %v583
        %v822 = vsel %vm818, %v805, %v585
        %v823 = vsel %vm818, %v806, %v587
        %v824 = vsel %vm818, %v807, %v589
        %v825 = vsel %vm818, %v808, %v591
        %v826 = vsel %vm818, %v809, %v593
        %v827 = vsel %vm818, %v810, %v595
        %v828 = vsel %vm818, %v811, %v597
        %v829 = vsel %vm818, %v812, %v599
        %v830 = vsel %vm818, %v813, %v601
        %v831 = vsel %vm818, %v814, %v603
        %v832 = vsel %vm818, %v815, %v605
        %v833 = vsel %vm818, %v816, %v607
        %v834 = vsel %vm818, %v817, %v609
        %vm835 = vcmask 228352
        %v836 = vsel %vm835, %v819, %v633
        %v837 = vsel %vm835, %v820, %v635
        %v838 = vsel %vm835, %v821, %v637
        %v839 = vsel %vm835, %v822, %v639
        %v840 = vsel %vm835, %v823, %v641
        %v841 = vsel %vm835, %v824, %v643
        %v842 = vsel %vm835, %v825, %v645
        %v843 = vsel %vm835, %v826, %v647
        %v844 = vsel %vm835, %v827, %v649
        %v845 = vsel %vm835, %v828, %v651
        %v846 = vsel %vm835, %v829, %v653
        %v847 = vsel %vm835, %v830, %v655
        %v848 = vsel %vm835, %v831, %v657
        %v849 = vsel %vm835, %v832, %v659
        %v850 = vsel %vm835, %v833, %v661
        %v851 = vsel %vm835, %v834, %v663
        %vm852 = vcmask 261120
        %v853 = vsel %vm852, %v836, %v686
        %v854 = vsel %vm852, %v837, %v688
        %v855 = vsel %vm852, %v838, %v690
        %v856 = vsel %vm852, %v839, %v692
        %v857 = vsel %vm852, %v840, %v694
        %v858 = vsel %vm852, %v841, %v696
        %v859 = vsel %vm852, %v842, %v698
        %v860 = vsel %vm852, %v843, %v700
        %v861 = vsel %vm852, %v844, %v702
        %v862 = vsel %vm852, %v845, %v704
        %v863 = vsel %vm852, %v846, %v706
        %v864 = vsel %vm852, %v847, %v708
        %v865 = vsel %vm852, %v848, %v710
        %v866 = vsel %vm852, %v849, %v712
        %v867 = vsel %vm852, %v850, %v714
        %v868 = vsel %vm852, %v851, %v716
        %v869 = vld [vmem:[%s1] sm:$0xff]
        %v870 = vld [vmem:[%s1 + $0x8] sm:$0xff]
        %v871 = vld [vmem:[%s1 + $0x10] sm:$0xff]
        %v872 = vld [vmem:[%s1 + $0x18] sm:$0xff]
        %v873 = vld [vmem:[%s1 + $0x20] sm:$0xf]
        %v874 = vld [vmem:[%s2] sm:$0x1]
        %v876 = vlaneseq
        %v877 = vshrl.u32 %v876, 7
        %v878 = vsub.s32 0, %v877
        %v879 = vrot.slane %v874, %v878
        %vm881 = vcmask 293888
        %v883 = vsel %vm881, %v853, 0
        %v886 = vsel %vm881, %v854, 0
        %v889 = vsel %vm881, %v855, 0
        %v892 = vsel %vm881, %v856, 0
        %v895 = vsel %vm881, %v857, 0
        %v898 = vsel %vm881, %v858, 0
        %v901 = vsel %vm881, %v859, 0
        %v904 = vsel %vm881, %v860, 0
        %v907 = vsel %vm881, %v861, 0
        %v910 = vsel %vm881, %v862, 0
        %v913 = vsel %vm881, %v863, 0
        %v916 = vsel %vm881, %v864, 0
        %v919 = vsel %vm881, %v865, 0
        %v922 = vsel %vm881, %v866, 0
        %v925 = vsel %vm881, %v867, 0
        %v928 = vsel %vm881, %v868, 0
        %vm930 = vcmask 1043456
        %v932 = vsel %vm930, %v873, 0
        %934 = vmatprep.subr.mxu0 0.0
        %935 = vmatpush1.msra.mxu0 %v869
        %936 = vmatprep.subr.mxu0 0.0
        %937 = vmatpush1.msra.mxu0 %v870
        %938 = vmatprep.subr.mxu0 0.0
        %939 = vmatpush1.msra.mxu0 %v871
        %940 = vmatprep.subr.mxu0 0.0
        %941 = vmatpush1.msra.mxu0 %v872
        %942 = vmatprep.subr.mxu0 0.0
        %943 = vmatpush1.msra.mxu0 %v932
        %944 = vmatprep.subr.mxu0 0.0
        %945 = vmatpush1.msra.mxu0 0.0
        %946 = vmatprep.subr.mxu0 0.0
        %947 = vmatpush1.msra.mxu0 0.0
        %948 = vmatprep.subr.mxu0 0.0
        %949 = vmatpush1.msra.mxu0 0.0
        %950 = vmatprep.subr.mxu0 0.0
        %951 = vmatpush1.msra.mxu0 0.0
        %952 = vmatprep.subr.mxu0 0.0
        %953 = vmatpush1.msra.mxu0 0.0
        %954 = vmatprep.subr.mxu0 0.0
        %955 = vmatpush1.msra.mxu0 0.0
        %956 = vmatprep.subr.mxu0 0.0
        %957 = vmatpush1.msra.mxu0 0.0
        %958 = vmatprep.subr.mxu0 0.0
        %959 = vmatpush1.msra.mxu0 0.0
        %960 = vmatprep.subr.mxu0 0.0
        %961 = vmatpush1.msra.mxu0 0.0
        %962 = vmatprep.subr.mxu0 0.0
        %963 = vmatpush1.msra.mxu0 0.0
        %964 = vmatprep.subr.mxu0 0.0
        %965 = vmatpush1.msra.mxu0 0.0
        %966 = vmatprep.subr.mxu0 0.0
        %967 = vmatpush1.msra.mxu0 0.0
        %968 = vmatprep.subr.mxu0 0.0
        %969 = vmatpush1.msra.mxu0 0.0
        %970 = vmatprep.subr.mxu0 0.0
        %971 = vmatpush1.msra.mxu0 0.0
        %972 = vmatprep.subr.mxu0 0.0
        %973 = vmatpush1.msra.mxu0 0.0
        %974 = vmatprep.subr.mxu0 0.0
        %975 = vmatpush1.msra.mxu0 0.0
        %976 = vmatprep.subr.mxu0 0.0
        %977 = vmatpush1.msra.mxu0 0.0
        %978 = vmatprep.subr.mxu0 0.0
        %979 = vmatpush1.msra.mxu0 0.0
        %980 = vmatprep.subr.mxu0 0.0
        %981 = vmatpush1.msra.mxu0 0.0
        %982 = vmatprep.subr.mxu0 0.0
        %983 = vmatpush1.msra.mxu0 0.0
        %984 = vmatprep.subr.mxu0 0.0
        %985 = vmatpush1.msra.mxu0 0.0
        %986 = vmatprep.subr.mxu0 0.0
        %987 = vmatpush1.msra.mxu0 0.0
        %988 = vmatprep.subr.mxu0 0.0
        %989 = vmatpush1.msra.mxu0 0.0
        %990 = vmatprep.subr.mxu0 0.0
        %991 = vmatpush1.msra.mxu0 0.0
        %992 = vmatprep.subr.mxu0 0.0
        %993 = vmatpush1.msra.mxu0 0.0
        %994 = vmatprep.subr.mxu0 0.0
        %995 = vmatpush1.msra.mxu0 0.0
        %996 = vmatprep.subr.mxu0 0.0
        %997 = vmatpush1.msra.mxu0 0.0
        %998 = vmatprep.mubr.f32.mxu0 0.0
        %999 = vmatmul.mubr.f32.gmra.mrb[0].mxu0 %v883
        %v1000 = vpop.f32.mrb[0].mxu0
        %v1001 = vadd.f32 %v879, %v1000
        %v1002 = vpop.f32.mrb[0].mxu0
        %1003 = vmatprep.mubr.f32.mxu0 0.0
        %1004 = vmatmul.mubr.f32.gmra.mrb[0].mxu0 %v886
        %v1005 = vpop.f32.mrb[0].mxu0
        %v1006 = vadd.f32 %v879, %v1005
        %v1007 = vpop.f32.mrb[0].mxu0
        %1008 = vmatprep.mubr.f32.mxu0 0.0
        %1009 = vmatmul.mubr.f32.gmra.mrb[0].mxu0 %v889
        %v1010 = vpop.f32.mrb[0].mxu0
        %v1011 = vadd.f32 %v879, %v1010
        %v1012 = vpop.f32.mrb[0].mxu0
        %1013 = vmatprep.mubr.f32.mxu0 0.0
        %1014 = vmatmul.mubr.f32.gmra.mrb[0].mxu0 %v892
        %v1015 = vpop.f32.mrb[0].mxu0
        %v1016 = vadd.f32 %v879, %v1015
        %v1017 = vpop.f32.mrb[0].mxu0
        %1018 = vmatprep.mubr.f32.mxu0 0.0
        %1019 = vmatmul.mubr.f32.gmra.mrb[0].mxu0 %v895
        %v1020 = vpop.f32.mrb[0].mxu0
        %v1021 = vadd.f32 %v879, %v1020
        %v1022 = vpop.f32.mrb[0].mxu0
        %1023 = vmatprep.mubr.f32.mxu0 0.0
        %1024 = vmatmul.mubr.f32.gmra.mrb[0].mxu0 %v898
        %v1025 = vpop.f32.mrb[0].mxu0
        %v1026 = vadd.f32 %v879, %v1025
        %v1027 = vpop.f32.mrb[0].mxu0
        %1028 = vmatprep.mubr.f32.mxu0 0.0
        %1029 = vmatmul.mubr.f32.gmra.mrb[0].mxu0 %v901
        %v1030 = vpop.f32.mrb[0].mxu0
        %v1031 = vadd.f32 %v879, %v1030
        %v1032 = vpop.f32.mrb[0].mxu0
        %1033 = vmatprep.mubr.f32.mxu0 0.0
        %1034 = vmatmul.mubr.f32.gmra.mrb[0].mxu0 %v904
        %v1035 = vpop.f32.mrb[0].mxu0
        %v1036 = vadd.f32 %v879, %v1035
        %v1037 = vpop.f32.mrb[0].mxu0
        %1038 = vmatprep.mubr.f32.mxu0 0.0
        %1039 = vmatmul.mubr.f32.gmra.mrb[0].mxu0 %v907
        %v1040 = vpop.f32.mrb[0].mxu0
        %v1041 = vadd.f32 %v879, %v1040
        %v1042 = vpop.f32.mrb[0].mxu0
        %1043 = vmatprep.mubr.f32.mxu0 0.0
        %1044 = vmatmul.mubr.f32.gmra.mrb[0].mxu0 %v910
        %v1045 = vpop.f32.mrb[0].mxu0
        %v1046 = vadd.f32 %v879, %v1045
        %v1047 = vpop.f32.mrb[0].mxu0
        %1048 = vmatprep.mubr.f32.mxu0 0.0
        %1049 = vmatmul.mubr.f32.gmra.mrb[0].mxu0 %v913
        %v1050 = vpop.f32.mrb[0].mxu0
        %v1051 = vadd.f32 %v879, %v1050
        %v1052 = vpop.f32.mrb[0].mxu0
        %1053 = vmatprep.mubr.f32.mxu0 0.0
        %1054 = vmatmul.mubr.f32.gmra.mrb[0].mxu0 %v916
        %v1055 = vpop.f32.mrb[0].mxu0
        %v1056 = vadd.f32 %v879, %v1055
        %v1057 = vpop.f32.mrb[0].mxu0
        %1058 = vmatprep.mubr.f32.mxu0 0.0
        %1059 = vmatmul.mubr.f32.gmra.mrb[0].mxu0 %v919
        %v1060 = vpop.f32.mrb[0].mxu0
        %v1061 = vadd.f32 %v879, %v1060
        %v1062 = vpop.f32.mrb[0].mxu0
        %1063 = vmatprep.mubr.f32.mxu0 0.0
        %1064 = vmatmul.mubr.f32.gmra.mrb[0].mxu0 %v922
        %v1065 = vpop.f32.mrb[0].mxu0
        %v1066 = vadd.f32 %v879, %v1065
        %v1067 = vpop.f32.mrb[0].mxu0
        %1068 = vmatprep.mubr.f32.mxu0 0.0
        %1069 = vmatmul.mubr.f32.gmra.mrb[0].mxu0 %v925
        %v1070 = vpop.f32.mrb[0].mxu0
        %v1071 = vadd.f32 %v879, %v1070
        %v1072 = vpop.f32.mrb[0].mxu0
        %1073 = vmatprep.mubr.f32.mxu0 0.0
        %1074 = vmatmul.mubr.f32.gmra.mrb[0].mxu0 %v928
        %v1075 = vpop.f32.mrb[0].mxu0
        %v1076 = vadd.f32 %v879, %v1075
        %v1077 = vpop.f32.mrb[0].mxu0
        %1078 = vdwg.mxu0
        %vm1079 = vcmp.gt.f32.partialorder %v1001, 0.0
        %vm1080 = vcmp.gt.f32.partialorder %v1006, 0.0
        %vm1081 = vcmp.gt.f32.partialorder %v1011, 0.0
        %vm1082 = vcmp.gt.f32.partialorder %v1016, 0.0
        %vm1083 = vcmp.gt.f32.partialorder %v1021, 0.0
        %vm1084 = vcmp.gt.f32.partialorder %v1026, 0.0
        %vm1085 = vcmp.gt.f32.partialorder %v1031, 0.0
        %vm1086 = vcmp.gt.f32.partialorder %v1036, 0.0
        %vm1087 = vcmp.gt.f32.partialorder %v1041, 0.0
        %vm1088 = vcmp.gt.f32.partialorder %v1046, 0.0
        %vm1089 = vcmp.gt.f32.partialorder %v1051, 0.0
        %vm1090 = vcmp.gt.f32.partialorder %v1056, 0.0
        %vm1091 = vcmp.gt.f32.partialorder %v1061, 0.0
        %vm1092 = vcmp.gt.f32.partialorder %v1066, 0.0
        %vm1093 = vcmp.gt.f32.partialorder %v1071, 0.0
        %vm1094 = vcmp.gt.f32.partialorder %v1076, 0.0
        %v1095 = vmul.f32 %v1001, 0.1
        %v1096 = vmul.f32 %v1006, 0.1
        %v1097 = vmul.f32 %v1011, 0.1
        %v1098 = vmul.f32 %v1016, 0.1
        %v1099 = vmul.f32 %v1021, 0.1
        %v1100 = vmul.f32 %v1026, 0.1
        %v1101 = vmul.f32 %v1031, 0.1
        %v1102 = vmul.f32 %v1036, 0.1
        %v1103 = vmul.f32 %v1041, 0.1
        %v1104 = vmul.f32 %v1046, 0.1
        %v1105 = vmul.f32 %v1051, 0.1
        %v1106 = vmul.f32 %v1056, 0.1
        %v1107 = vmul.f32 %v1061, 0.1
        %v1108 = vmul.f32 %v1066, 0.1
        %v1109 = vmul.f32 %v1071, 0.1
        %v1110 = vmul.f32 %v1076, 0.1
        %v1111 = vsel %vm1079, %v1001, %v1095
        %v1112 = vsel %vm1080, %v1006, %v1096
        %v1113 = vsel %vm1081, %v1011, %v1097
        %v1114 = vsel %vm1082, %v1016, %v1098
        %v1115 = vsel %vm1083, %v1021, %v1099
        %v1116 = vsel %vm1084, %v1026, %v1100
        %v1117 = vsel %vm1085, %v1031, %v1101
        %v1118 = vsel %vm1086, %v1036, %v1102
        %v1119 = vsel %vm1087, %v1041, %v1103
        %v1120 = vsel %vm1088, %v1046, %v1104
        %v1121 = vsel %vm1089, %v1051, %v1105
        %v1122 = vsel %vm1090, %v1056, %v1106
        %v1123 = vsel %vm1091, %v1061, %v1107
        %v1124 = vsel %vm1092, %v1066, %v1108
        %v1125 = vsel %vm1093, %v1071, %v1109
        %v1126 = vsel %vm1094, %v1076, %v1110
        %1127 = vst [vmem:[%s177] sm:$0xff] %v1111
        %1128 = vst [vmem:[%s177 + $0x8] sm:$0xff] %v1112
        %1129 = vst [vmem:[%s177 + $0x10] sm:$0xff] %v1113
        %1130 = vst [vmem:[%s177 + $0x18] sm:$0xff] %v1114
        %1131 = vst [vmem:[%s177 + $0x20] sm:$0xff] %v1115
        %1132 = vst [vmem:[%s177 + $0x28] sm:$0xff] %v1116
        %1133 = vst [vmem:[%s177 + $0x30] sm:$0xff] %v1117
        %1134 = vst [vmem:[%s177 + $0x38] sm:$0xff] %v1118
        %1135 = vst [vmem:[%s177 + $0x40] sm:$0xff] %v1119
        %1136 = vst [vmem:[%s177 + $0x48] sm:$0xff] %v1120
        %1137 = vst [vmem:[%s177 + $0x50] sm:$0xff] %v1121
        %1138 = vst [vmem:[%s177 + $0x58] sm:$0xff] %v1122
        %1139 = vst [vmem:[%s177 + $0x60] sm:$0xff] %v1123
        %1140 = vst [vmem:[%s177 + $0x68] sm:$0xff] %v1124
        %1141 = vst [vmem:[%s177 + $0x70] sm:$0xff] %v1125
        %1142 = vst [vmem:[%s177 + $0x78] sm:$0xff] %v1126
        %s1143 = sand.u32 %s107, 1
        %s1144 = scalar_lea.sflag [#allocation3], %s1143
        %s1145 = sand.u32 %s107, 1
        %s1146 = smul.addr %s1145, 128
        %s1147 = scalar_lea.vmem [#allocation2], %s1146
        // Predicated region
        $region33: #{tpu_custom_call.1} parent=31 // pred_check
          %p1148 = pneg %p117
        $region34: #{tpu_custom_call.1} parent=31 // pred_check_branch
          %1150 = sbr.rel (%p1148) target = $region36
        $region35: #{tpu_custom_call.1} parent=31 // pred_region
          %s1151 = smul.u32 16, %s22
          %s1153 = ssub.s32 2048, 2048
          %1154 = vsyncadd %s1144, %s1153
          %s1155 = smul.addr %s21, 32
          %s1156 = sadd.s32 %s1151, %s1155
          %s1157 = smul.addr %s1156, 128
          %s1158 = scalar_lea.hbm %s3, %s1157
          %s1159 = sshll.u32 %s1147, 4
          %s1160 = int_to_ptr.vmem [resolvable:$true] %s1159
          %1165 = dma.vmem_to_hbm [thread:$0]  %s1160, 2048, %s1158, %s1144, 128, 128, 8
        $region36: #{tpu_custom_call.1} parent=31 // pred_fallthru
          _
      $region32: #{tpu_custom_call.1} parent=5 // pred_fallthru
        _
      %p1166 = scmp.le.s32.totalorder 2, %s12
      // Predicated region
      $region37: #{tpu_custom_call.1} parent=5 // pred_check
        %p1167 = pneg %p1166
      $region38: #{tpu_custom_call.1} parent=5 // pred_check_branch
        %1169 = sbr.rel (%p1167) target = $region40
      $region39: #{tpu_custom_call.1} parent=5 // pred_region
        %s1170 = ssub.s32 %s12, 2
        // Predicated region
        $region41: #{tpu_custom_call.1} parent=39 // pred_check
          %p1171 = pneg %p123
        $region42: #{tpu_custom_call.1} parent=39 // pred_check_branch
          %1173 = sbr.rel (%p1171) target = $region44
        $region43: #{tpu_custom_call.1} parent=39 // pred_region
          %s1174 = sand.u32 %s108, 1
          %s1175 = scalar_lea.sflag [#allocation3], %s1174
          %s1176 = sand.u32 %s108, 1
          %s1177 = smul.addr %s1176, 128
          %s1178 = scalar_lea.vmem [#allocation2], %s1177
          %1179 = dma.done %s1175, 2048
        $region44: #{tpu_custom_call.1} parent=39 // pred_fallthru
          _
      $region40: #{tpu_custom_call.1} parent=5 // pred_fallthru
        _
    $region6: #{tpu_custom_call.1} parent=1 // loop_footer
      %s16 = sadd.s32 1, %s12
    $region7: #{tpu_custom_call.1} parent=1 // loop_footer_branch
      %11 = sbr.rel target = $region3
    $region8: #{tpu_custom_call.1} parent=1 // loop_exit
      _
    %1180 = vsyncpa [#allocation3], 1
    %s1181 = scalar_lea.sflag [#allocation3], 1
    %1182 = vsyncpa %s1181, 1

</llo_original>
